<compile_context>
chip_gen: v7x
topology: tpu7x:2x2x1
jax: 0.10.0
libtpu: 0.0.40
codegen_flags: <defaults>
</compile_context>

<pallas_src>
import functools

import jax
import jax.numpy as jnp
from jax.experimental import pallas as pl
from jax.experimental.pallas import tpu as pltpu

NEG_SLOPE = 0.01  # PyTorch nn.LeakyReLU default


def _leaky_relu(x):
    return jnp.where(x >= 0, x, NEG_SLOPE * x)


def code_compressor_kernel(
    xb_t_ref,    # (n_values, TB)        f32  VMEM  x_binary^T tile
    xs_t_ref,    # (n_values, TB)        f32  VMEM  x_soft^T tile
    w1b_ref,     # (n_dims, n_values)    mxu  VMEM  W1[:, :n_values]  (out, in)
    w1s_ref,     # (n_dims, n_values)    mxu  VMEM  W1[:, n_values:]
    b1_ref,      # (n_dims, 1)           f32  VMEM
    w2_ref,      # (n_dims, 1)           f32  VMEM  Linear(n_dims,1).weight as column
    b2_ref,      # (1, 1)                f32  SMEM
    w3_ref,      # (n_dims, 1)           f32  VMEM  Linear(1,n_dims).weight
    b3_ref,      # (n_dims, 1)           f32  VMEM
    w4_ref,      # (n_dims, n_dims)      mxu  VMEM  (out, in)
    b4_ref,      # (n_dims, 1)           f32  VMEM
    z_t_ref,     # (1, TB)               f32  VMEM  out: z^T
    pred_t_ref,  # (n_dims, TB)          f32  VMEM  out: pred^T
    sq_t_ref,    # (1, TB)               f32  VMEM  out: per-sample sq-err sums
    *, n_values, mxu_dtype,
):
    xb = xb_t_ref[...]                                   # f32
    xs = xs_t_ref[...]

    # ---- encoder Linear(n_dims, n_dims): concat fused as a split MXU matmul,
    #      computed transposed: h^T = W1 @ [x_bin; x_soft]^T + b1 ----
    h = (
        jnp.dot(w1b_ref[...], xb.astype(mxu_dtype),
                preferred_element_type=jnp.float32)
        + jnp.dot(w1s_ref[...], xs.astype(mxu_dtype),
                  preferred_element_type=jnp.float32)
        + b1_ref[...]
    )
    h = _leaky_relu(h)                                   # (n_dims, TB) f32

    # ---- encoder Linear(n_dims, 1): degenerate (M=1) matmul -> VPU multiply
    #      + sublane reduction, all f32 ----
    z = jnp.tanh(jnp.sum(h * w2_ref[...], axis=0, keepdims=True) + b2_ref[0, 0])
    z_t_ref[...] = z                                     # (1, TB) lane-dense

    # ---- decoder Linear(1, n_dims): degenerate (K=1) matmul -> VPU broadcast ----
    d = _leaky_relu(w3_ref[...] * z + b3_ref[...])       # (n_dims, TB) f32

    # ---- decoder Linear(n_dims, n_dims): pred^T = W4 @ d^T + b4 ----
    pred = (
        jnp.dot(w4_ref[...], d.astype(mxu_dtype),
                preferred_element_type=jnp.float32)
        + b4_ref[...]
    )
    pred_t_ref[...] = pred                               # (n_dims, TB) lane-dense

    # ---- loss pieces: mse(pred, x, 'none').sum(features), per sample ----
    # Features are the sublane axis here; n_values=16 keeps the static slice on
    # an 8-row sublane boundary.
    db = pred[:n_values, :] - xb
    ds = pred[n_values:, :] - xs
    sq_t_ref[...] = (
        jnp.sum(db * db, axis=0, keepdims=True)
        + jnp.sum(ds * ds, axis=0, keepdims=True)
    )                                                    # (1, TB) lane-dense


def _pick_block_b(B):
    """Batch (lane-axis) tile. Big tiles amortize the ~0.35 us per-grid-step
    pipeline overhead; even at 8192 rows the double-buffered tile set is only
    a few MB, well inside the default scoped-VMEM budget on all generations
    (16 MiB v5e, 32 MiB v6e/v7x)."""
    if B <= 8192:
        return B
    for cand in (8192, 4096, 2048, 1024, 512, 256, 128):
        if B % cand == 0:
            return cand
    return B  # batch not a multiple of 128: fall back to a single block


def code_compressor_forward(x_binary, x_soft, params, *, block_b=None,
                            mxu_dtype=jnp.bfloat16):
    """Fused CodeCompressor forward. Returns (loss, z, pred_x)."""
    B, n_values = x_binary.shape
    assert x_soft.shape == (B, n_values)
    n_dims = 2 * n_values

    if block_b is None:
        block_b = _pick_block_b(B)
    assert B % block_b == 0, "batch must be divisible by the batch tile"
    num_blocks = B // block_b

    f32 = jnp.float32
    # Lane-dense working layout: batch on the lane (last) axis.
    xb_t = x_binary.astype(f32).T                        # (n_values, B)
    xs_t = x_soft.astype(f32).T

    # PyTorch (out, in) layouts -> kernel layouts (free wrapper-side plumbing).
    w1 = params["W1"]
    w1_bin = w1[:, :n_values].astype(mxu_dtype)          # pre-split (review)
    w1_soft = w1[:, n_values:].astype(mxu_dtype)
    b1 = params["b1"].reshape(n_dims, 1).astype(f32)
    w2 = params["W2"].reshape(n_dims, 1).astype(f32)     # (1, n_dims) -> column
    b2 = params["b2"].reshape(1, 1).astype(f32)
    w3 = params["W3"].reshape(n_dims, 1).astype(f32)
    b3 = params["b3"].reshape(n_dims, 1).astype(f32)
    w4 = params["W4"].astype(mxu_dtype)
    b4 = params["b4"].reshape(n_dims, 1).astype(f32)

    kernel = functools.partial(
        code_compressor_kernel, n_values=n_values, mxu_dtype=mxu_dtype
    )

    vmem = pltpu.MemorySpace.VMEM
    smem = pltpu.MemorySpace.SMEM
    col = lambda i: (0, i)   # batch-tiled (lane-axis) operands
    rep = lambda i: (0, 0)   # weights: same block every step -> stay resident

    # Deeper input buffering only pays once there are enough batch tiles for
    # exposed DMA to matter; no effect at the demo size.
    deep = dict(pipeline_mode=pl.Buffered(3)) if num_blocks >= 4 else {}

    # Advisory cost estimate: 2 MXU layers + VPU layers / loss.
    flops = 4 * B * n_dims * n_dims + 12 * B * n_dims
    bytes_accessed = (
        4 * 2 * B * n_values                 # x_binary^T, x_soft^T (f32)
        + 2 * 2 * n_dims * n_dims            # bf16 w1 split + w4
        + 4 * 6 * n_dims                     # small vectors / scalars
        + 4 * (n_dims + 2) * B               # pred^T, z^T, per-sample sums
    )
    cost = pl.CostEstimate(
        flops=flops, transcendentals=B, bytes_accessed=bytes_accessed
    )

    z_t, pred_t, sq_t = pl.pallas_call(
        kernel,
        grid=(num_blocks,),
        in_specs=[
            pl.BlockSpec((n_values, block_b), col, memory_space=vmem, **deep),  # x_bin^T
            pl.BlockSpec((n_values, block_b), col, memory_space=vmem, **deep),  # x_soft^T
            pl.BlockSpec((n_dims, n_values), rep, memory_space=vmem),           # w1_bin
            pl.BlockSpec((n_dims, n_values), rep, memory_space=vmem),           # w1_soft
            pl.BlockSpec((n_dims, 1), rep, memory_space=vmem),                   # b1
            pl.BlockSpec((n_dims, 1), rep, memory_space=vmem),                   # w2
            pl.BlockSpec(memory_space=smem),                                     # b2 (1,1)
            pl.BlockSpec((n_dims, 1), rep, memory_space=vmem),                   # w3
            pl.BlockSpec((n_dims, 1), rep, memory_space=vmem),                   # b3
            pl.BlockSpec((n_dims, n_dims), rep, memory_space=vmem),              # w4
            pl.BlockSpec((n_dims, 1), rep, memory_space=vmem),                   # b4
        ],
        out_specs=(
            pl.BlockSpec((1, block_b), col, memory_space=vmem),        # z^T
            pl.BlockSpec((n_dims, block_b), col, memory_space=vmem),   # pred^T
            pl.BlockSpec((1, block_b), col, memory_space=vmem),        # sq sums
        ),
        out_shape=(
            jax.ShapeDtypeStruct((1, B), f32),
            jax.ShapeDtypeStruct((n_dims, B), f32),
            jax.ShapeDtypeStruct((1, B), f32),
        ),
        compiler_params=pltpu.CompilerParams(
            # No resident accumulator: every grid step writes disjoint output
            # blocks, so the batch axis is "parallel" (v7x megacore sharding).
            dimension_semantics=("parallel",),
        ),
        cost_estimate=cost,
    )(
        xb_t, xs_t, w1_bin, w1_soft, b1, w2, b2, w3, b3, w4, b4,
    )

    # Thin layout plumbing + the final mean in the wrapper (keeps the batch
    # grid axis fully parallel).
    loss = jnp.sum(sq_t) * (1.0 / B)
    z = z_t.T                                            # (B, 1)
    pred_x = pred_t.T                                    # (B, n_dims)
    return loss, z, pred_x


def init_params(key, n_values):
    """Deterministic synthetic parameters in PyTorch (out, in) layouts."""
    n_dims = 2 * n_values
    keys = jax.random.split(key, 8)

    def u(k, shape, fan_in):
        bound = 1.0 / (fan_in ** 0.5)
        return jax.random.uniform(k, shape, jnp.float32, -bound, bound)

    return {
        "W1": u(keys[0], (n_dims, n_dims), n_dims),   # encoder Linear(n_dims, n_dims)
        "b1": u(keys[1], (n_dims,), n_dims),
        "W2": u(keys[2], (1, n_dims), n_dims),        # encoder Linear(n_dims, 1)
        "b2": u(keys[3], (1,), n_dims),
        "W3": u(keys[4], (n_dims, 1), 1),             # decoder Linear(1, n_dims)
        "b3": u(keys[5], (n_dims,), 1),
        "W4": u(keys[6], (n_dims, n_dims), n_dims),   # decoder Linear(n_dims, n_dims)
        "b4": u(keys[7], (n_dims,), n_dims),
    }


def reference_forward(x_binary, x_soft, params, mxu_dtype=jnp.float32):
    """Pure-JAX reference matching the PyTorch module semantics. `mxu_dtype`
    lets the two big Linears use the same low-precision operands as the
    kernel (f32 accumulation either way)."""
    x = jnp.concatenate([x_binary, x_soft], axis=1).astype(jnp.float32)

    def big_linear(a, w, b):   # y = a @ w^T + b
        return jnp.dot(a.astype(mxu_dtype), w.T.astype(mxu_dtype),
                       preferred_element_type=jnp.float32) + b

    h = _leaky_relu(big_linear(x, params["W1"], params["b1"]))
    z = jnp.tanh(h @ params["W2"].T + params["b2"])
    d = _leaky_relu(z @ params["W3"].T + params["b3"])
    pred_x = big_linear(d, params["W4"], params["b4"])
    loss = jnp.mean(jnp.sum((pred_x - x) ** 2, axis=1))
    return loss, z, pred_x


if __name__ == "__main__":
    key = jax.random.PRNGKey(0)
    k_params, k_bin, k_soft = jax.random.split(key, 3)

    B = 8
    n_values = 16          # -> n_dims = 32
    params = init_params(k_params, n_values)

    x_binary = (jax.random.uniform(k_bin, (B, n_values)) > 0.5).astype(jnp.float32)
    x_soft = jax.random.uniform(k_soft, (B, n_values), jnp.float32)

    loss, z, pred_x = code_compressor_forward(x_binary, x_soft, params)
    jax.block_until_ready((loss, z, pred_x))

    # Tight check against a reference using the same bf16 MXU operands.
    ref_loss, ref_z, ref_pred = reference_forward(
        x_binary, x_soft, params, mxu_dtype=jnp.bfloat16)
    assert jnp.allclose(loss, ref_loss, atol=1e-4, rtol=1e-4)
    assert jnp.allclose(z, ref_z, atol=1e-4, rtol=1e-4)
    assert jnp.allclose(pred_x, ref_pred, atol=1e-4, rtol=1e-4)

    # Loose sanity check against exact f32 module semantics (bf16 MXU rounding).
    f32_loss, f32_z, f32_pred = reference_forward(x_binary, x_soft, params)
    assert jnp.allclose(loss, f32_loss, atol=5e-2, rtol=5e-2)
    assert jnp.allclose(z, f32_z, atol=2e-2, rtol=2e-2)
    assert jnp.allclose(pred_x, f32_pred, atol=2e-2, rtol=2e-2)

    print("KERNEL_OK")
</pallas_src>

<mosaic_0001>
module attributes {stable_mosaic.version = 11 : i64} {
  func.func @code_compressor_kernel(%arg0: i32, %arg1: memref<16x8xf32, #tpu.memory_space<vmem>>, %arg2: memref<16x8xf32, #tpu.memory_space<vmem>>, %arg3: memref<32x16xbf16, #tpu.memory_space<vmem>>, %arg4: memref<32x16xbf16, #tpu.memory_space<vmem>>, %arg5: memref<32x1xf32, #tpu.memory_space<vmem>>, %arg6: memref<32x1xf32, #tpu.memory_space<vmem>>, %arg7: memref<1x1xf32, #tpu.memory_space<smem>>, %arg8: memref<32x1xf32, #tpu.memory_space<vmem>>, %arg9: memref<32x1xf32, #tpu.memory_space<vmem>>, %arg10: memref<32x32xbf16, #tpu.memory_space<vmem>>, %arg11: memref<32x1xf32, #tpu.memory_space<vmem>>, %arg12: memref<1x8xf32, #tpu.memory_space<vmem>>, %arg13: memref<32x8xf32, #tpu.memory_space<vmem>>, %arg14: memref<1x8xf32, #tpu.memory_space<vmem>>) attributes {dimension_semantics = [#tpu.dimension_semantics<parallel>], iteration_bounds = array<i64: 1>, scalar_prefetch = 0 : i64, scratch_operands = 0 : i64, tpu.core_type = #tpu.core_type<tc>, window_params = [{transform_indices = @transform_0, window_bounds = array<i64: 16, 8>}, {transform_indices = @transform_1, window_bounds = array<i64: 16, 8>}, {pipeline_mode = #tpu.pipeline_mode<synchronous>, transform_indices = @transform_2, window_bounds = array<i64: 32, 16>}, {pipeline_mode = #tpu.pipeline_mode<synchronous>, transform_indices = @transform_3, window_bounds = array<i64: 32, 16>}, {pipeline_mode = #tpu.pipeline_mode<synchronous>, transform_indices = @transform_4, window_bounds = array<i64: 32, 1>}, {pipeline_mode = #tpu.pipeline_mode<synchronous>, transform_indices = @transform_5, window_bounds = array<i64: 32, 1>}, {transform_indices = @transform_6, window_bounds = array<i64: 1, 1>}, {pipeline_mode = #tpu.pipeline_mode<synchronous>, transform_indices = @transform_7, window_bounds = array<i64: 32, 1>}, {pipeline_mode = #tpu.pipeline_mode<synchronous>, transform_indices = @transform_8, window_bounds = array<i64: 32, 1>}, {pipeline_mode = #tpu.pipeline_mode<synchronous>, transform_indices = @transform_9, window_bounds = array<i64: 32, 32>}, {pipeline_mode = #tpu.pipeline_mode<synchronous>, transform_indices = @transform_10, window_bounds = array<i64: 32, 1>}, {transform_indices = @transform_11, window_bounds = array<i64: 1, 8>}, {transform_indices = @transform_12, window_bounds = array<i64: 32, 8>}, {transform_indices = @transform_13, window_bounds = array<i64: 1, 8>}]} {
    %c0 = arith.constant 0 : index
    %c0_0 = arith.constant 0 : index
    %0 = vector.load %arg1[%c0, %c0_0] : memref<16x8xf32, #tpu.memory_space<vmem>>, vector<16x8xf32>
    %c0_1 = arith.constant 0 : index
    %c0_2 = arith.constant 0 : index
    %1 = vector.load %arg2[%c0_1, %c0_2] : memref<16x8xf32, #tpu.memory_space<vmem>>, vector<16x8xf32>
    %c0_3 = arith.constant 0 : index
    %c0_4 = arith.constant 0 : index
    %2 = vector.load %arg3[%c0_3, %c0_4] : memref<32x16xbf16, #tpu.memory_space<vmem>>, vector<32x16xbf16>
    %3 = arith.truncf %0 : vector<16x8xf32> to vector<16x8xbf16>
    %cst = arith.constant dense<0.000000e+00> : vector<32x8xf32>
    %4 = tpu.matmul %2, %3, %cst {dimension_numbers = #tpu.dot_dimension_numbers<[1], [0], [0], [1], [0, 0, 1, 1], [], []>} : vector<32x16xbf16>, vector<16x8xbf16>, vector<32x8xf32> -> vector<32x8xf32>
    %c0_5 = arith.constant 0 : index
    %c0_6 = arith.constant 0 : index
    %5 = vector.load %arg4[%c0_5, %c0_6] : memref<32x16xbf16, #tpu.memory_space<vmem>>, vector<32x16xbf16>
    %6 = arith.truncf %1 : vector<16x8xf32> to vector<16x8xbf16>
    %cst_7 = arith.constant dense<0.000000e+00> : vector<32x8xf32>
    %7 = tpu.matmul %5, %6, %cst_7 {dimension_numbers = #tpu.dot_dimension_numbers<[1], [0], [0], [1], [0, 0, 1, 1], [], []>} : vector<32x16xbf16>, vector<16x8xbf16>, vector<32x8xf32> -> vector<32x8xf32>
    %8 = arith.addf %4, %7 : vector<32x8xf32>
    %c0_8 = arith.constant 0 : index
    %c0_9 = arith.constant 0 : index
    %9 = vector.load %arg5[%c0_8, %c0_9] : memref<32x1xf32, #tpu.memory_space<vmem>>, vector<32x1xf32>
    %10 = vector.broadcast %9 : vector<32x1xf32> to vector<32x8xf32>
    %11 = arith.addf %8, %10 : vector<32x8xf32>
    %cst_10 = arith.constant 0.000000e+00 : f32
    %12 = vector.broadcast %cst_10 : f32 to vector<32x8xf32>
    %13 = arith.cmpf oge, %11, %12 : vector<32x8xf32>
    %cst_11 = arith.constant 0.00999999977 : f32
    %14 = vector.broadcast %cst_11 : f32 to vector<32x8xf32>
    %15 = arith.mulf %14, %11 : vector<32x8xf32>
    %16 = arith.select %13, %11, %15 : vector<32x8xi1>, vector<32x8xf32>
    %c0_12 = arith.constant 0 : index
    %c0_13 = arith.constant 0 : index
    %17 = vector.load %arg6[%c0_12, %c0_13] : memref<32x1xf32, #tpu.memory_space<vmem>>, vector<32x1xf32>
    %18 = vector.broadcast %17 : vector<32x1xf32> to vector<32x8xf32>
    %19 = arith.mulf %16, %18 : vector<32x8xf32>
    %cst_14 = arith.constant dense<0.000000e+00> : vector<8xf32>
    %20 = vector.multi_reduction <add>, %19, %cst_14 [0] : vector<32x8xf32> to vector<8xf32>
    %21 = vector.shape_cast %20 : vector<8xf32> to vector<1x8xf32>
    %c0_15 = arith.constant 0 : index
    %c0_16 = arith.constant 0 : index
    %22 = memref.load %arg7[%c0_15, %c0_16] : memref<1x1xf32, #tpu.memory_space<smem>>
    %23 = vector.broadcast %22 : f32 to vector<1x8xf32>
    %24 = arith.addf %21, %23 : vector<1x8xf32>
    %25 = math.tanh %24 : vector<1x8xf32>
    %c0_17 = arith.constant 0 : index
    %c0_18 = arith.constant 0 : index
    %26 = vector.load %arg12[%c0_17, %c0_18] : memref<1x8xf32, #tpu.memory_space<vmem>>, vector<1x8xf32>
    tpu.vector_store %arg12[%c0_17, %c0_18], %25 {strides = array<i32>} : memref<1x8xf32, #tpu.memory_space<vmem>>, vector<1x8xf32>,
    %c0_19 = arith.constant 0 : index
    %c0_20 = arith.constant 0 : index
    %27 = vector.load %arg8[%c0_19, %c0_20] : memref<32x1xf32, #tpu.memory_space<vmem>>, vector<32x1xf32>
    %28 = vector.broadcast %27 : vector<32x1xf32> to vector<32x8xf32>
    %29 = vector.broadcast %25 : vector<1x8xf32> to vector<32x8xf32>
    %30 = arith.mulf %28, %29 : vector<32x8xf32>
    %c0_21 = arith.constant 0 : index
    %c0_22 = arith.constant 0 : index
    %31 = vector.load %arg9[%c0_21, %c0_22] : memref<32x1xf32, #tpu.memory_space<vmem>>, vector<32x1xf32>
    %32 = vector.broadcast %31 : vector<32x1xf32> to vector<32x8xf32>
    %33 = arith.addf %30, %32 : vector<32x8xf32>
    %cst_23 = arith.constant 0.000000e+00 : f32
    %34 = vector.broadcast %cst_23 : f32 to vector<32x8xf32>
    %35 = arith.cmpf oge, %33, %34 : vector<32x8xf32>
    %cst_24 = arith.constant 0.00999999977 : f32
    %36 = vector.broadcast %cst_24 : f32 to vector<32x8xf32>
    %37 = arith.mulf %36, %33 : vector<32x8xf32>
    %38 = arith.select %35, %33, %37 : vector<32x8xi1>, vector<32x8xf32>
    %c0_25 = arith.constant 0 : index
    %c0_26 = arith.constant 0 : index
    %39 = vector.load %arg10[%c0_25, %c0_26] : memref<32x32xbf16, #tpu.memory_space<vmem>>, vector<32x32xbf16>
    %40 = arith.truncf %38 : vector<32x8xf32> to vector<32x8xbf16>
    %cst_27 = arith.constant dense<0.000000e+00> : vector<32x8xf32>
    %41 = tpu.matmul %39, %40, %cst_27 {dimension_numbers = #tpu.dot_dimension_numbers<[1], [0], [0], [1], [0, 0, 1, 1], [], []>} : vector<32x32xbf16>, vector<32x8xbf16>, vector<32x8xf32> -> vector<32x8xf32>
    %c0_28 = arith.constant 0 : index
    %c0_29 = arith.constant 0 : index
    %42 = vector.load %arg11[%c0_28, %c0_29] : memref<32x1xf32, #tpu.memory_space<vmem>>, vector<32x1xf32>
    %43 = vector.broadcast %42 : vector<32x1xf32> to vector<32x8xf32>
    %44 = arith.addf %41, %43 : vector<32x8xf32>
    %c0_30 = arith.constant 0 : index
    %c0_31 = arith.constant 0 : index
    %45 = vector.load %arg13[%c0_30, %c0_31] : memref<32x8xf32, #tpu.memory_space<vmem>>, vector<32x8xf32>
    tpu.vector_store %arg13[%c0_30, %c0_31], %44 {strides = array<i32>} : memref<32x8xf32, #tpu.memory_space<vmem>>, vector<32x8xf32>,
    %46 = vector.extract_strided_slice %44 {offsets = [0, 0], sizes = [16, 8], strides = [1, 1]} : vector<32x8xf32> to vector<16x8xf32>
    %47 = arith.subf %46, %0 : vector<16x8xf32>
    %48 = vector.extract_strided_slice %44 {offsets = [16, 0], sizes = [16, 8], strides = [1, 1]} : vector<32x8xf32> to vector<16x8xf32>
    %49 = arith.subf %48, %1 : vector<16x8xf32>
    %50 = arith.mulf %47, %47 : vector<16x8xf32>
    %cst_32 = arith.constant dense<0.000000e+00> : vector<8xf32>
    %51 = vector.multi_reduction <add>, %50, %cst_32 [0] : vector<16x8xf32> to vector<8xf32>
    %52 = vector.shape_cast %51 : vector<8xf32> to vector<1x8xf32>
    %53 = arith.mulf %49, %49 : vector<16x8xf32>
    %cst_33 = arith.constant dense<0.000000e+00> : vector<8xf32>
    %54 = vector.multi_reduction <add>, %53, %cst_33 [0] : vector<16x8xf32> to vector<8xf32>
    %55 = vector.shape_cast %54 : vector<8xf32> to vector<1x8xf32>
    %56 = arith.addf %52, %55 : vector<1x8xf32>
    %c0_34 = arith.constant 0 : index
    %c0_35 = arith.constant 0 : index
    %57 = vector.load %arg14[%c0_34, %c0_35] : memref<1x8xf32, #tpu.memory_space<vmem>>, vector<1x8xf32>
    tpu.vector_store %arg14[%c0_34, %c0_35], %56 {strides = array<i32>} : memref<1x8xf32, #tpu.memory_space<vmem>>, vector<1x8xf32>,
    return
  }
  func.func @transform_0(%arg0: i32) -> (i32, i32) {
    %c0_i32 = arith.constant 0 : i32
    %c0_i32_0 = arith.constant 0 : i32
    return %c0_i32, %arg0 : i32, i32
  }
  func.func @transform_1(%arg0: i32) -> (i32, i32) {
    %c0_i32 = arith.constant 0 : i32
    %c0_i32_0 = arith.constant 0 : i32
    return %c0_i32, %arg0 : i32, i32
  }
  func.func @transform_2(%arg0: i32) -> (i32, i32) {
    %c0_i32 = arith.constant 0 : i32
    %c0_i32_0 = arith.constant 0 : i32
    %c0_i32_1 = arith.constant 0 : i32
    return %c0_i32, %c0_i32_0 : i32, i32
  }
  func.func @transform_3(%arg0: i32) -> (i32, i32) {
    %c0_i32 = arith.constant 0 : i32
    %c0_i32_0 = arith.constant 0 : i32
    %c0_i32_1 = arith.constant 0 : i32
    return %c0_i32, %c0_i32_0 : i32, i32
  }
  func.func @transform_4(%arg0: i32) -> (i32, i32) {
    %c0_i32 = arith.constant 0 : i32
    %c0_i32_0 = arith.constant 0 : i32
    %c0_i32_1 = arith.constant 0 : i32
    return %c0_i32, %c0_i32_0 : i32, i32
  }
  func.func @transform_5(%arg0: i32) -> (i32, i32) {
    %c0_i32 = arith.constant 0 : i32
    %c0_i32_0 = arith.constant 0 : i32
    %c0_i32_1 = arith.constant 0 : i32
    return %c0_i32, %c0_i32_0 : i32, i32
  }
  func.func @transform_6(%arg0: i32) -> (i32, i32) {
    %c0_i32 = arith.constant 0 : i32
    %c0_i32_0 = arith.constant 0 : i32
    %c0_i32_1 = arith.constant 0 : i32
    return %c0_i32, %c0_i32_0 : i32, i32
  }
  func.func @transform_7(%arg0: i32) -> (i32, i32) {
    %c0_i32 = arith.constant 0 : i32
    %c0_i32_0 = arith.constant 0 : i32
    %c0_i32_1 = arith.constant 0 : i32
    return %c0_i32, %c0_i32_0 : i32, i32
  }
  func.func @transform_8(%arg0: i32) -> (i32, i32) {
    %c0_i32 = arith.constant 0 : i32
    %c0_i32_0 = arith.constant 0 : i32
    %c0_i32_1 = arith.constant 0 : i32
    return %c0_i32, %c0_i32_0 : i32, i32
  }
  func.func @transform_9(%arg0: i32) -> (i32, i32) {
    %c0_i32 = arith.constant 0 : i32
    %c0_i32_0 = arith.constant 0 : i32
    %c0_i32_1 = arith.constant 0 : i32
    return %c0_i32, %c0_i32_0 : i32, i32
  }
  func.func @transform_10(%arg0: i32) -> (i32, i32) {
    %c0_i32 = arith.constant 0 : i32
    %c0_i32_0 = arith.constant 0 : i32
    %c0_i32_1 = arith.constant 0 : i32
    return %c0_i32, %c0_i32_0 : i32, i32
  }
  func.func @transform_11(%arg0: i32) -> (i32, i32) {
    %c0_i32 = arith.constant 0 : i32
    %c0_i32_0 = arith.constant 0 : i32
    return %c0_i32, %arg0 : i32, i32
  }
  func.func @transform_12(%arg0: i32) -> (i32, i32) {
    %c0_i32 = arith.constant 0 : i32
    %c0_i32_0 = arith.constant 0 : i32
    return %c0_i32, %arg0 : i32, i32
  }
  func.func @transform_13(%arg0: i32) -> (i32, i32) {
    %c0_i32 = arith.constant 0 : i32
    %c0_i32_0 = arith.constant 0 : i32
    return %c0_i32, %arg0 : i32, i32
  }
}

</mosaic_0001>

<llo_original>
// kernel: tpu_custom_call.1
$region0: #{tpu_custom_call.1}
  #allocation0 [shape = 'u32[]', space=smem, size = 0x4, offset = 0x4, fixed_abs, tag = 'smem constant byte address 0x4 - core index']
  #allocation1 [shape = 'u32[144,128]{1,0:T(1,128)}', space=vmem, size = 0x12000, scoped, tag = 'internal scratch']
  #allocation2 [shape = 'f32[1,1]{1,0:T(1,128)S(6)}', space=smem, size = 0x200, scoped, tag = 'scoped memory for tpu_custom_call.1']
  %s0 = inlined_call_operand.vmem [shape: f32[16,8], index: 0, kind: input, shape index: {}]
  %s1 = inlined_call_operand.vmem [shape: f32[16,8], index: 1, kind: input, shape index: {}]
  %s2 = inlined_call_operand.vmem [shape: bf16[32,16], index: 2, kind: input, shape index: {}]
  %s3 = inlined_call_operand.vmem [shape: bf16[32,16], index: 3, kind: input, shape index: {}]
  %s4 = inlined_call_operand.vmem [shape: f32[32,1], index: 4, kind: input, shape index: {}]
  %s5 = inlined_call_operand.vmem [shape: f32[32,1], index: 5, kind: input, shape index: {}]
  %s6 = inlined_call_operand.<no memory space> [shape: f32[1,1], index: 6, kind: input, shape index: {}]
  %s7 = inlined_call_operand.vmem [shape: f32[32,1], index: 7, kind: input, shape index: {}]
  %s8 = inlined_call_operand.vmem [shape: f32[32,1], index: 8, kind: input, shape index: {}]
  %s9 = inlined_call_operand.vmem [shape: bf16[32,32], index: 9, kind: input, shape index: {}]
  %s10 = inlined_call_operand.vmem [shape: f32[32,1], index: 10, kind: input, shape index: {}]
  %s11 = inlined_call_operand.hbm [shape: f32[1,8], index: 11, kind: output, shape index: {0}]
  %s12 = inlined_call_operand.vmem [shape: f32[32,8], index: 12, kind: output, shape index: {1}]
  %s13 = inlined_call_operand.hbm [shape: f32[1,8], index: 13, kind: output, shape index: {2}]
  %14 = xla_tuple %s11, %s12, %s13
  %s15 = sld [smem:[#allocation0]]
  $region70: #{tpu_custom_call.1} parent=0
    _
  %s17 = ssub.s32 1, %s15
  %s18 = scalar_select 0, %s17, %s15
  %19 = sst [smem:[#allocation2]] %s6
  $region1: #{tpu_custom_call.1} parent=0
    #allocation3 [shape = 'u8[512]{0}', space=vmem, size = 0x400, scoped, tag = 'output window, operand 0, single buffered']
    #allocation4 [shape = 's32[1]{0}', space=sflag, size = 0x4, scoped, tag = 'scoped memory for tpu_custom_call.1']
    #allocation5 [shape = 'u8[512]{0}', space=vmem, size = 0x400, scoped, tag = 'output window, operand 2, single buffered']
    #allocation6 [shape = 's32[1]{0}', space=sflag, size = 0x4, scoped, tag = 'scoped memory for tpu_custom_call.1']
    %20 = vsyncpa [#allocation4], 0
    %21 = vsyncpa [#allocation6], 0
    // Predicated region
    $region2: #{tpu_custom_call.1} parent=1 // pred_check
      _
    $region3: #{tpu_custom_call.1} parent=1 // pred_check_branch
      %23 = sbr.rel (0) target = $region5
    $region4: #{tpu_custom_call.1} parent=1 // pred_region
      _
    $region5: #{tpu_custom_call.1} parent=1 // pred_fallthru
      _
    // Predicated region
    $region6: #{tpu_custom_call.1} parent=1 // pred_check
      _
    $region7: #{tpu_custom_call.1} parent=1 // pred_check_branch
      %25 = sbr.rel (0) target = $region9
    $region8: #{tpu_custom_call.1} parent=1 // pred_region
      _
    $region9: #{tpu_custom_call.1} parent=1 // pred_fallthru
      _
    // Predicated region
    $region10: #{tpu_custom_call.1} parent=1 // pred_check
      _
    $region11: #{tpu_custom_call.1} parent=1 // pred_check_branch
      %27 = sbr.rel (0) target = $region13
    $region12: #{tpu_custom_call.1} parent=1 // pred_region
      _
    $region13: #{tpu_custom_call.1} parent=1 // pred_fallthru
      _
    // Predicated region
    $region14: #{tpu_custom_call.1} parent=1 // pred_check
      _
    $region15: #{tpu_custom_call.1} parent=1 // pred_check_branch
      %29 = sbr.rel (0) target = $region17
    $region16: #{tpu_custom_call.1} parent=1 // pred_region
      _
    $region17: #{tpu_custom_call.1} parent=1 // pred_fallthru
      _
    // Predicated region
    $region18: #{tpu_custom_call.1} parent=1 // pred_check
      _
    $region19: #{tpu_custom_call.1} parent=1 // pred_check_branch
      %31 = sbr.rel (0) target = $region21
    $region20: #{tpu_custom_call.1} parent=1 // pred_region
      _
    $region21: #{tpu_custom_call.1} parent=1 // pred_fallthru
      _
    // Predicated region
    $region22: #{tpu_custom_call.1} parent=1 // pred_check
      _
    $region23: #{tpu_custom_call.1} parent=1 // pred_check_branch
      %33 = sbr.rel (0) target = $region25
    $region24: #{tpu_custom_call.1} parent=1 // pred_region
      _
    $region25: #{tpu_custom_call.1} parent=1 // pred_fallthru
      _
    // Predicated region
    $region26: #{tpu_custom_call.1} parent=1 // pred_check
      _
    $region27: #{tpu_custom_call.1} parent=1 // pred_check_branch
      %35 = sbr.rel (0) target = $region29
    $region28: #{tpu_custom_call.1} parent=1 // pred_region
      _
    $region29: #{tpu_custom_call.1} parent=1 // pred_fallthru
      _
    // Predicated region
    $region30: #{tpu_custom_call.1} parent=1 // pred_check
      _
    $region31: #{tpu_custom_call.1} parent=1 // pred_check_branch
      %37 = sbr.rel (0) target = $region33
    $region32: #{tpu_custom_call.1} parent=1 // pred_region
      _
    $region33: #{tpu_custom_call.1} parent=1 // pred_fallthru
      _
    // Predicated region
    $region34: #{tpu_custom_call.1} parent=1 // pred_check
      _
    $region35: #{tpu_custom_call.1} parent=1 // pred_check_branch
      %39 = sbr.rel (0) target = $region37
    $region36: #{tpu_custom_call.1} parent=1 // pred_region
      _
    $region37: #{tpu_custom_call.1} parent=1 // pred_fallthru
      _
    // Predicated region
    $region38: #{tpu_custom_call.1} parent=1 // pred_check
      _
    $region39: #{tpu_custom_call.1} parent=1 // pred_check_branch
      %41 = sbr.rel (0) target = $region41
    $region40: #{tpu_custom_call.1} parent=1 // pred_region
      _
    $region41: #{tpu_custom_call.1} parent=1 // pred_fallthru
      _
    // Predicated region
    $region42: #{tpu_custom_call.1} parent=1 // pred_check
      _
    $region43: #{tpu_custom_call.1} parent=1 // pred_check_branch
      %43 = sbr.rel (0) target = $region45
    $region44: #{tpu_custom_call.1} parent=1 // pred_region
      _
    $region45: #{tpu_custom_call.1} parent=1 // pred_fallthru
      _
    %v45 = vld [vmem:[%s0] sm:$0xff]
    %v46 = vld [vmem:[%s0 + $0x8] sm:$0xff]
    %v47 = vld [vmem:[%s1] sm:$0xff]
    %v48 = vld [vmem:[%s1 + $0x8] sm:$0xff]
    %v49 = vld [vmem:[%s2] sm:$0xf]
    %v50 = vld [vmem:[%s2 + $0x4] sm:$0xf]
    %v51 = vld [vmem:[%s2 + $0x8] sm:$0xf]
    %v52 = vld [vmem:[%s2 + $0xc] sm:$0xf]
    %v53 = vpack.c.bf16 %v46, %v45
    %v54 = vld [vmem:[%s3] sm:$0xf]
    %v55 = vld [vmem:[%s3 + $0x4] sm:$0xf]
    %v56 = vld [vmem:[%s3 + $0x8] sm:$0xf]
    %v57 = vld [vmem:[%s3 + $0xc] sm:$0xf]
    %v58 = vpack.c.bf16 %v48, %v47
    %v63 = vunpack.c.l.b16 %v54
    %v64 = vunpack.c.l.b16 %v55
    %v65 = vunpack.c.l.b16 %v56
    %v66 = vunpack.c.l.b16 %v57
    %v67 = vpack.c.b16 %v64, %v63
    %v68 = vpack.c.b16 %v66, %v65
    %vm69 = vcmask 130048
    %v71 = vsel %vm69, %v67, 0
    %v74 = vsel %vm69, %v68, 0
    %76 = vmatprep.subr.bf16.mxu0 0
    %77 = vmatpush1.bf16.msra.mxu0 %v58
    %78 = vmatprep.subr.bf16.mxu0 0
    %79 = vmatpush1.bf16.msra.mxu0 0
    %80 = vmatprep.subr.bf16.mxu0 0
    %81 = vmatpush1.bf16.msra.mxu0 0
    %82 = vmatprep.subr.bf16.mxu0 0
    %83 = vmatpush1.bf16.msra.mxu0 0
    %84 = vmatprep.subr.bf16.mxu0 0
    %85 = vmatpush1.bf16.msra.mxu0 0
    %86 = vmatprep.subr.bf16.mxu0 0
    %87 = vmatpush1.bf16.msra.mxu0 0
    %88 = vmatprep.subr.bf16.mxu0 0
    %89 = vmatpush1.bf16.msra.mxu0 0
    %90 = vmatprep.subr.bf16.mxu0 0
    %91 = vmatpush1.bf16.msra.mxu0 0
    %92 = vmatprep.subr.bf16.mxu0 0
    %93 = vmatpush1.bf16.msra.mxu0 0
    %94 = vmatprep.subr.bf16.mxu0 0
    %95 = vmatpush1.bf16.msra.mxu0 0
    %96 = vmatprep.subr.bf16.mxu0 0
    %97 = vmatpush1.bf16.msra.mxu0 0
    %98 = vmatprep.subr.bf16.mxu0 0
    %99 = vmatpush1.bf16.msra.mxu0 0
    %100 = vmatprep.subr.bf16.mxu0 0
    %101 = vmatpush1.bf16.msra.mxu0 0
    %102 = vmatprep.subr.bf16.mxu0 0
    %103 = vmatpush1.bf16.msra.mxu0 0
    %104 = vmatprep.subr.bf16.mxu0 0
    %105 = vmatpush1.bf16.msra.mxu0 0
    %106 = vmatprep.subr.bf16.mxu0 0
    %107 = vmatpush1.bf16.msra.mxu0 0
    %108 = vmatprep.mubr.bf16.mxu0 0
    %109 = vmatmul.mubr.bf16.gmra.mrb[0].mxu0 %v71
    %v110 = vpop.f32.mrb[0].mxu0
    %v111 = vadd.f32 0.0, %v110
    %v112 = vpop.f32.mrb[0].mxu0
    %v113 = vpop.f32.mrb[0].mxu0
    %v114 = vadd.f32 0.0, %v113
    %v115 = vpop.f32.mrb[0].mxu0
    %116 = vmatprep.mubr.bf16.mxu0 0
    %117 = vmatmul.mubr.bf16.gmra.mrb[0].mxu0 %v74
    %v118 = vpop.f32.mrb[0].mxu0
    %v119 = vadd.f32 0.0, %v118
    %v120 = vpop.f32.mrb[0].mxu0
    %v121 = vpop.f32.mrb[0].mxu0
    %v122 = vadd.f32 0.0, %v121
    %v123 = vpop.f32.mrb[0].mxu0
    %124 = vdwg.mxu0
    %v129 = vunpack.c.l.b16 %v49
    %v130 = vunpack.c.l.b16 %v50
    %v131 = vunpack.c.l.b16 %v51
    %v132 = vunpack.c.l.b16 %v52
    %v133 = vpack.c.b16 %v130, %v129
    %v134 = vpack.c.b16 %v132, %v131
    %v136 = vsel %vm69, %v133, 0
    %v139 = vsel %vm69, %v134, 0
    %141 = vmatprep.subr.bf16.mxu0 0
    %142 = vmatpush1.bf16.msra.mxu0 %v53
    %143 = vmatprep.subr.bf16.mxu0 0
    %144 = vmatpush1.bf16.msra.mxu0 0
    %145 = vmatprep.subr.bf16.mxu0 0
    %146 = vmatpush1.bf16.msra.mxu0 0
    %147 = vmatprep.subr.bf16.mxu0 0
    %148 = vmatpush1.bf16.msra.mxu0 0
    %149 = vmatprep.subr.bf16.mxu0 0
    %150 = vmatpush1.bf16.msra.mxu0 0
    %151 = vmatprep.subr.bf16.mxu0 0
    %152 = vmatpush1.bf16.msra.mxu0 0
    %153 = vmatprep.subr.bf16.mxu0 0
    %154 = vmatpush1.bf16.msra.mxu0 0
    %155 = vmatprep.subr.bf16.mxu0 0
    %156 = vmatpush1.bf16.msra.mxu0 0
    %157 = vmatprep.subr.bf16.mxu0 0
    %158 = vmatpush1.bf16.msra.mxu0 0
    %159 = vmatprep.subr.bf16.mxu0 0
    %160 = vmatpush1.bf16.msra.mxu0 0
    %161 = vmatprep.subr.bf16.mxu0 0
    %162 = vmatpush1.bf16.msra.mxu0 0
    %163 = vmatprep.subr.bf16.mxu0 0
    %164 = vmatpush1.bf16.msra.mxu0 0
    %165 = vmatprep.subr.bf16.mxu0 0
    %166 = vmatpush1.bf16.msra.mxu0 0
    %167 = vmatprep.subr.bf16.mxu0 0
    %168 = vmatpush1.bf16.msra.mxu0 0
    %169 = vmatprep.subr.bf16.mxu0 0
    %170 = vmatpush1.bf16.msra.mxu0 0
    %171 = vmatprep.subr.bf16.mxu0 0
    %172 = vmatpush1.bf16.msra.mxu0 0
    %173 = vmatprep.mubr.bf16.mxu0 0
    %174 = vmatmul.mubr.bf16.gmra.mrb[0].mxu0 %v136
    %v175 = vpop.f32.mrb[0].mxu0
    %v176 = vadd.f32 %v111, %v175
    %v177 = vpop.f32.mrb[0].mxu0
    %v178 = vpop.f32.mrb[0].mxu0
    %v179 = vadd.f32 %v114, %v178
    %v180 = vpop.f32.mrb[0].mxu0
    %181 = vmatprep.mubr.bf16.mxu0 0
    %182 = vmatmul.mubr.bf16.gmra.mrb[0].mxu0 %v139
    %v183 = vpop.f32.mrb[0].mxu0
    %v184 = vadd.f32 %v119, %v183
    %v185 = vpop.f32.mrb[0].mxu0
    %v186 = vpop.f32.mrb[0].mxu0
    %v187 = vadd.f32 %v122, %v186
    %v188 = vpop.f32.mrb[0].mxu0
    %189 = vdwg.mxu0
    %v190 = vld [vmem:[%s4] sm:$0xff]
    %v191 = vld [vmem:[%s4 + $0x8] sm:$0xff]
    %v192 = vld [vmem:[%s4 + $0x10] sm:$0xff]
    %v193 = vld [vmem:[%s4 + $0x18] sm:$0xff]
    %195 = vset.pattern.permute.xlu0 0
    %196 = vperm.xlu0 %195, %v190
    %v197 = vpop.permute.xlu0 %196
    %200 = vset.pattern.permute.xlu0 0
    %201 = vperm.xlu0 %200, %v191
    %v202 = vpop.permute.xlu0 %201
    %205 = vset.pattern.permute.xlu0 0
    %206 = vperm.xlu0 %205, %v192
    %v207 = vpop.permute.xlu0 %206
    %210 = vset.pattern.permute.xlu0 0
    %211 = vperm.xlu0 %210, %v193
    %v212 = vpop.permute.xlu0 %211
    %v214 = vadd.f32 %v176, %v197
    %v215 = vadd.f32 %v179, %v202
    %v216 = vadd.f32 %v184, %v207
    %v217 = vadd.f32 %v187, %v212
    %vm218 = vcmp.ge.f32.partialorder %v214, 0.0
    %vm219 = vcmp.ge.f32.partialorder %v215, 0.0
    %vm220 = vcmp.ge.f32.partialorder %v216, 0.0
    %vm221 = vcmp.ge.f32.partialorder %v217, 0.0
    %v222 = vmul.f32 %v214, 0.01
    %v223 = vmul.f32 %v215, 0.01
    %v224 = vmul.f32 %v216, 0.01
    %v225 = vmul.f32 %v217, 0.01
    %v226 = vsel %vm218, %v214, %v222
    %v227 = vsel %vm219, %v215, %v223
    %v228 = vsel %vm220, %v216, %v224
    %v229 = vsel %vm221, %v217, %v225
    %v230 = vld [vmem:[%s5] sm:$0xff]
    %v231 = vld [vmem:[%s5 + $0x8] sm:$0xff]
    %v232 = vld [vmem:[%s5 + $0x10] sm:$0xff]
    %v233 = vld [vmem:[%s5 + $0x18] sm:$0xff]
    %235 = vset.pattern.permute.xlu0 0
    %236 = vperm.xlu0 %235, %v230
    %v237 = vpop.permute.xlu0 %236
    %240 = vset.pattern.permute.xlu0 0
    %241 = vperm.xlu0 %240, %v231
    %v242 = vpop.permute.xlu0 %241
    %245 = vset.pattern.permute.xlu0 0
    %246 = vperm.xlu0 %245, %v232
    %v247 = vpop.permute.xlu0 %246
    %250 = vset.pattern.permute.xlu0 0
    %251 = vperm.xlu0 %250, %v233
    %v252 = vpop.permute.xlu0 %251
    %v254 = vmul.f32 %v226, %v237
    %v255 = vmul.f32 %v227, %v242
    %v256 = vmul.f32 %v228, %v247
    %v257 = vmul.f32 %v229, %v252
    %vm258 = vcmask 64512
    %v259 = vsel %vm258, %v254, 0.0
    %v260 = vsel %vm258, %v255, 0.0
    %v261 = vadd.f32 %v259, %v260
    %v262 = vsel %vm258, %v256, 0.0
    %v263 = vadd.f32 %v261, %v262
    %v264 = vsel %vm258, %v257, 0.0
    %v265 = vadd.f32 %v263, %v264
    %v266 = vrot.slane %v265, 4
    %v267 = vadd.f32 %v265, %v266
    %v268 = vrot.slane %v267, 2
    %v269 = vadd.f32 %v267, %v268
    %v270 = vrot.slane %v269, 1
    %v271 = vadd.f32 %v269, %v270
    %s272 = sld [smem:[#allocation2]]
    %v273 = vstv %s272
    %v274 = vadd.f32 %v271, %v273
    %v275 = vtanh.pop %v274
    %vm276 = vcmask 57344
    %277 = vst.msk [vmem:[#allocation3] sm:$0x1] %vm276, %v275
    %v278 = vld [vmem:[%s7] sm:$0xff]
    %v279 = vld [vmem:[%s7 + $0x8] sm:$0xff]
    %v280 = vld [vmem:[%s7 + $0x10] sm:$0xff]
    %v281 = vld [vmem:[%s7 + $0x18] sm:$0xff]
    %283 = vset.pattern.permute.xlu0 0
    %284 = vperm.xlu0 %283, %v278
    %v285 = vpop.permute.xlu0 %284
    %288 = vset.pattern.permute.xlu0 0
    %289 = vperm.xlu0 %288, %v279
    %v290 = vpop.permute.xlu0 %289
    %293 = vset.pattern.permute.xlu0 0
    %294 = vperm.xlu0 %293, %v280
    %v295 = vpop.permute.xlu0 %294
    %298 = vset.pattern.permute.xlu0 0
    %299 = vperm.xlu0 %298, %v281
    %v300 = vpop.permute.xlu0 %299
    %v302 = vmul.f32 %v285, %v275
    %v303 = vmul.f32 %v290, %v275
    %v304 = vmul.f32 %v295, %v275
    %v305 = vmul.f32 %v300, %v275
    %v306 = vld [vmem:[%s8] sm:$0xff]
    %v307 = vld [vmem:[%s8 + $0x8] sm:$0xff]
    %v308 = vld [vmem:[%s8 + $0x10] sm:$0xff]
    %v309 = vld [vmem:[%s8 + $0x18] sm:$0xff]
    %311 = vset.pattern.permute.xlu0 0
    %312 = vperm.xlu0 %311, %v306
    %v313 = vpop.permute.xlu0 %312
    %316 = vset.pattern.permute.xlu0 0
    %317 = vperm.xlu0 %316, %v307
    %v318 = vpop.permute.xlu0 %317
    %321 = vset.pattern.permute.xlu0 0
    %322 = vperm.xlu0 %321, %v308
    %v323 = vpop.permute.xlu0 %322
    %326 = vset.pattern.permute.xlu0 0
    %327 = vperm.xlu0 %326, %v309
    %v328 = vpop.permute.xlu0 %327
    %v330 = vadd.f32 %v302, %v313
    %v331 = vadd.f32 %v303, %v318
    %v332 = vadd.f32 %v304, %v323
    %v333 = vadd.f32 %v305, %v328
    %vm334 = vcmp.ge.f32.partialorder %v330, 0.0
    %vm335 = vcmp.ge.f32.partialorder %v331, 0.0
    %vm336 = vcmp.ge.f32.partialorder %v332, 0.0
    %vm337 = vcmp.ge.f32.partialorder %v333, 0.0
    %v338 = vmul.f32 %v330, 0.01
    %v339 = vmul.f32 %v331, 0.01
    %v340 = vmul.f32 %v332, 0.01
    %v341 = vmul.f32 %v333, 0.01
    %v342 = vsel %vm334, %v330, %v338
    %v343 = vsel %vm335, %v331, %v339
    %v344 = vsel %vm336, %v332, %v340
    %v345 = vsel %vm337, %v333, %v341
    %v346 = vld [vmem:[%s9] sm:$0xf]
    %v347 = vld [vmem:[%s9 + $0x4] sm:$0xf]
    %v348 = vld [vmem:[%s9 + $0x8] sm:$0xf]
    %v349 = vld [vmem:[%s9 + $0xc] sm:$0xf]
    %v350 = vpack.c.bf16 %v343, %v342
    %v351 = vpack.c.bf16 %v345, %v344
    %v352 = vld [vmem:[%s10] sm:$0xff]
    %v353 = vld [vmem:[%s10 + $0x8] sm:$0xff]
    %v354 = vld [vmem:[%s10 + $0x10] sm:$0xff]
    %v355 = vld [vmem:[%s10 + $0x18] sm:$0xff]
    %357 = vset.pattern.permute.xlu0 0
    %358 = vperm.xlu0 %357, %v352
    %v359 = vpop.permute.xlu0 %358
    %362 = vset.pattern.permute.xlu0 0
    %363 = vperm.xlu0 %362, %v353
    %v364 = vpop.permute.xlu0 %363
    %367 = vset.pattern.permute.xlu0 0
    %368 = vperm.xlu0 %367, %v354
    %v369 = vpop.permute.xlu0 %368
    %372 = vset.pattern.permute.xlu0 0
    %373 = vperm.xlu0 %372, %v355
    %v374 = vpop.permute.xlu0 %373
    %v380 = vunpack.c.l.b16 %v346
    %v381 = vunpack.c.l.b16 %v347
    %v382 = vunpack.c.l.b16 %v348
    %v383 = vunpack.c.l.b16 %v349
    %v384 = vpack.c.b16 %v381, %v380
    %v385 = vpack.c.b16 %v383, %v382
    %vm386 = vcmask 261120
    %v388 = vsel %vm386, %v384, 0
    %v391 = vsel %vm386, %v385, 0
    %393 = vmatprep.subr.bf16.mxu0 0
    %394 = vmatpush1.bf16.msra.mxu0 %v350
    %395 = vmatprep.subr.bf16.mxu0 0
    %396 = vmatpush1.bf16.msra.mxu0 %v351
    %397 = vmatprep.subr.bf16.mxu0 0
    %398 = vmatpush1.bf16.msra.mxu0 0
    %399 = vmatprep.subr.bf16.mxu0 0
    %400 = vmatpush1.bf16.msra.mxu0 0
    %401 = vmatprep.subr.bf16.mxu0 0
    %402 = vmatpush1.bf16.msra.mxu0 0
    %403 = vmatprep.subr.bf16.mxu0 0
    %404 = vmatpush1.bf16.msra.mxu0 0
    %405 = vmatprep.subr.bf16.mxu0 0
    %406 = vmatpush1.bf16.msra.mxu0 0
    %407 = vmatprep.subr.bf16.mxu0 0
    %408 = vmatpush1.bf16.msra.mxu0 0
    %409 = vmatprep.subr.bf16.mxu0 0
    %410 = vmatpush1.bf16.msra.mxu0 0
    %411 = vmatprep.subr.bf16.mxu0 0
    %412 = vmatpush1.bf16.msra.mxu0 0
    %413 = vmatprep.subr.bf16.mxu0 0
    %414 = vmatpush1.bf16.msra.mxu0 0
    %415 = vmatprep.subr.bf16.mxu0 0
    %416 = vmatpush1.bf16.msra.mxu0 0
    %417 = vmatprep.subr.bf16.mxu0 0
    %418 = vmatpush1.bf16.msra.mxu0 0
    %419 = vmatprep.subr.bf16.mxu0 0
    %420 = vmatpush1.bf16.msra.mxu0 0
    %421 = vmatprep.subr.bf16.mxu0 0
    %422 = vmatpush1.bf16.msra.mxu0 0
    %423 = vmatprep.subr.bf16.mxu0 0
    %424 = vmatpush1.bf16.msra.mxu0 0
    %425 = vmatprep.mubr.bf16.mxu0 0
    %426 = vmatmul.mubr.bf16.gmra.mrb[0].mxu0 %v388
    %v427 = vpop.f32.mrb[0].mxu0
    %v428 = vadd.f32 %v359, %v427
    %v429 = vpop.f32.mrb[0].mxu0
    %v430 = vpop.f32.mrb[0].mxu0
    %v431 = vadd.f32 %v364, %v430
    %v432 = vpop.f32.mrb[0].mxu0
    %433 = vmatprep.mubr.bf16.mxu0 0
    %434 = vmatmul.mubr.bf16.gmra.mrb[0].mxu0 %v391
    %v435 = vpop.f32.mrb[0].mxu0
    %v436 = vadd.f32 %v369, %v435
    %v437 = vpop.f32.mrb[0].mxu0
    %v438 = vpop.f32.mrb[0].mxu0
    %v439 = vadd.f32 %v374, %v438
    %v440 = vpop.f32.mrb[0].mxu0
    %441 = vdwg.mxu0
    %442 = vst.msk [vmem:[%s12] sm:$0xff] %vm258, %v428
    %443 = vst.msk [vmem:[%s12 + $0x8] sm:$0xff] %vm258, %v431
    %444 = vst.msk [vmem:[%s12 + $0x10] sm:$0xff] %vm258, %v436
    %445 = vst.msk [vmem:[%s12 + $0x18] sm:$0xff] %vm258, %v439
    %v446 = vsub.f32 %v428, %v45
    %v447 = vsub.f32 %v431, %v46
    %v448 = vsub.f32 %v436, %v47
    %v449 = vsub.f32 %v439, %v48
    %v450 = vmul.f32 %v446, %v446
    %v451 = vmul.f32 %v447, %v447
    %v452 = vsel %vm258, %v450, 0.0
    %v453 = vsel %vm258, %v451, 0.0
    %v454 = vadd.f32 %v452, %v453
    %v455 = vrot.slane %v454, 4
    %v456 = vadd.f32 %v454, %v455
    %v457 = vrot.slane %v456, 2
    %v458 = vadd.f32 %v456, %v457
    %v459 = vrot.slane %v458, 1
    %v460 = vadd.f32 %v458, %v459
    %v461 = vmul.f32 %v448, %v448
    %v462 = vmul.f32 %v449, %v449
    %v463 = vsel %vm258, %v461, 0.0
    %v464 = vsel %vm258, %v462, 0.0
    %v465 = vadd.f32 %v463, %v464
    %v466 = vrot.slane %v465, 4
    %v467 = vadd.f32 %v465, %v466
    %v468 = vrot.slane %v467, 2
    %v469 = vadd.f32 %v467, %v468
    %v470 = vrot.slane %v469, 1
    %v471 = vadd.f32 %v469, %v470
    %v472 = vadd.f32 %v460, %v471
    %473 = vst.msk [vmem:[#allocation5] sm:$0x1] %vm276, %v472
    // Predicated region
    $region46: #{tpu_custom_call.1} parent=1 // pred_check
      _
    $region47: #{tpu_custom_call.1} parent=1 // pred_check_branch
      %475 = sbr.rel (0) target = $region49
    $region48: #{tpu_custom_call.1} parent=1 // pred_region
      %s477 = ssub.s32 16, 16
      %478 = vsyncadd [#allocation4], %s477
      %s480 = sshll.u32 [#allocation3], 4
      %s481 = int_to_ptr.vmem [resolvable:$true] %s480
      %483 = dma.vmem_to_hbm [thread:$0]  %s481, 16, %s11, [#allocation4]
    $region49: #{tpu_custom_call.1} parent=1 // pred_fallthru
      _
    // Predicated region
    $region50: #{tpu_custom_call.1} parent=1 // pred_check
      _
    $region51: #{tpu_custom_call.1} parent=1 // pred_check_branch
      %485 = sbr.rel (0) target = $region53
    $region52: #{tpu_custom_call.1} parent=1 // pred_region
      _
    $region53: #{tpu_custom_call.1} parent=1 // pred_fallthru
      _
    // Predicated region
    $region54: #{tpu_custom_call.1} parent=1 // pred_check
      _
    $region55: #{tpu_custom_call.1} parent=1 // pred_check_branch
      %487 = sbr.rel (0) target = $region57
    $region56: #{tpu_custom_call.1} parent=1 // pred_region
      %s489 = ssub.s32 16, 16
      %490 = vsyncadd [#allocation6], %s489
      %s492 = sshll.u32 [#allocation5], 4
      %s493 = int_to_ptr.vmem [resolvable:$true] %s492
      %495 = dma.vmem_to_hbm [thread:$0]  %s493, 16, %s13, [#allocation6]
    $region57: #{tpu_custom_call.1} parent=1 // pred_fallthru
      _
    // Predicated region
    $region58: #{tpu_custom_call.1} parent=1 // pred_check
      _
    $region59: #{tpu_custom_call.1} parent=1 // pred_check_branch
      %497 = sbr.rel (0) target = $region61
    $region60: #{tpu_custom_call.1} parent=1 // pred_region
      %498 = dma.done [#allocation4], 16
    $region61: #{tpu_custom_call.1} parent=1 // pred_fallthru
      _
    // Predicated region
    $region62: #{tpu_custom_call.1} parent=1 // pred_check
      _
    $region63: #{tpu_custom_call.1} parent=1 // pred_check_branch
      %500 = sbr.rel (0) target = $region65
    $region64: #{tpu_custom_call.1} parent=1 // pred_region
      _
    $region65: #{tpu_custom_call.1} parent=1 // pred_fallthru
      _
    // Predicated region
    $region66: #{tpu_custom_call.1} parent=1 // pred_check
      _
    $region67: #{tpu_custom_call.1} parent=1 // pred_check_branch
      %502 = sbr.rel (0) target = $region69
    $region68: #{tpu_custom_call.1} parent=1 // pred_region
      %503 = dma.done [#allocation6], 16
    $region69: #{tpu_custom_call.1} parent=1 // pred_fallthru
      _
    %504 = vsyncpa [#allocation4], 1
    %505 = vsyncpa [#allocation6], 1

</llo_original>
